<compile_context>
chip_gen: v6e
topology: v6e:2x2x1
jax: 0.10.0
libtpu: 0.0.40
codegen_flags: <defaults>
</compile_context>

<pallas_src>
import functools

import jax
import jax.numpy as jnp
from jax.experimental import pallas as pl
from jax.experimental.pallas import tpu as pltpu


def variational_encoder_kernel(
    x_ref,        # [TB, TK]              bf16   flattened input tile
    w_enc_ref,    # [D_pad, D_enc] or [TK, D_enc]  bf16  encoder weight (resident / streamed)
    b_enc_ref,    # [1, D_enc]            f32
    w_heads_ref,  # [D_enc, HP]           bf16   [fc_location | fc_scale | 0-pad] fused
    b_heads_ref,  # [1, HP]               f32
    out_ref,      # [TB, HP]              f32    [normalized location | softplus(scale)+1 | junk]
    acc_ref,      # [TB, D_enc]           f32    VMEM scratch accumulator over the K axis
    *,
    z_dim: int,
    tk: int,
    w_resident: bool,
):
    k = pl.program_id(1)

    # --- init accumulator on first K step ---
    @pl.when(k == 0)
    def _():
        acc_ref[...] = jnp.zeros_like(acc_ref)

    # --- encoder Linear: bf16 inputs, f32 accumulation on the MXU ---
    if w_resident:
        # Whole w_enc lives in VMEM; slice the current K chunk (aligned offset).
        off = pl.multiple_of(k * tk, tk)
        w_k = w_enc_ref[pl.ds(off, tk), :]
    else:
        w_k = w_enc_ref[...]

    acc_ref[...] += jnp.dot(x_ref[...], w_k, preferred_element_type=jnp.float32)

    # --- epilogue only once the full D_in reduction is done ---
    @pl.when(k == pl.num_programs(1) - 1)
    def _():
        h = jnp.maximum(acc_ref[...] + b_enc_ref[...], 0.0)          # ReLU (f32)

        # fused heads: one small bf16 matmul (f32 accumulate) instead of two
        heads = jnp.dot(
            h.astype(jnp.bfloat16), w_heads_ref[...],
            preferred_element_type=jnp.float32,
        ) + b_heads_ref[...]                                          # [TB, HP]

        col = jax.lax.broadcasted_iota(jnp.int32, heads.shape, 1)
        is_loc = col < z_dim

        # F.normalize(p=2, dim=1): x / max(||x||, 1e-12) == x * rsqrt(max(ss, 1e-24))
        loc = jnp.where(is_loc, heads, 0.0)
        sumsq = jnp.sum(loc * loc, axis=1, keepdims=True)
        inv_norm = jax.lax.rsqrt(jnp.maximum(sumsq, 1e-24))           # EUP rsqrt

        # softplus (torch threshold=20 semantics) + 1
        sp = jnp.where(
            heads > 20.0, heads, jnp.log1p(jnp.exp(jnp.minimum(heads, 20.0)))
        ) + 1.0

        out_ref[...] = jnp.where(is_loc, loc * inv_norm, sp)


def _vmem_budget_bytes():
    """Per-generation VMEM working-set budget (3/4 of physical capacity)."""
    try:
        cap = int(pltpu.get_tpu_info().vmem_capacity_bytes)
    except Exception:
        cap = 64 * 1024 * 1024  # v7x-safe fallback
    return (cap * 3) // 4


def _choose_tiles(B, D_in, tb_max, tk_max):
    # Batch tile: at least 2 batch blocks whenever B allows it (feeds both v7x
    # TensorCores); TB is a multiple of 8 (sublane constraint) or the full dim.
    if B <= 8:
        TB = B
    else:
        TB = max(8, min(tb_max, ((B + 15) // 16) * 8))
    B_pad = ((B + TB - 1) // TB) * TB

    # K tile: the full reduction dim if it fits, else the largest
    # multiple-of-128 divisor of D_in <= tk_max (avoids an extra padded copy
    # of x in HBM), else tk_max with padding.
    if D_in <= tk_max:
        TK = D_in
    else:
        TK = 0
        if D_in % 128 == 0:
            nblk = D_in // 128
            for m in range(min(tk_max // 128, nblk), 0, -1):
                if nblk % m == 0:
                    TK = m * 128
                    break
        if TK == 0:
            TK = tk_max
    D_pad = ((D_in + TK - 1) // TK) * TK
    return TB, B_pad, TK, D_pad


def variational_encoder(x_nchw, params, *, tb_max=512, tk_max=2048):
    """VariationalEncoder forward pass.

    x_nchw: [B, C, H, W]  (pass bf16 upstream to make the cast below a no-op)
    params: w_enc [D_in, D_enc], b_enc [1, D_enc],
            w_loc [D_enc, Z], b_loc [1, Z], w_scale [D_enc, 1], b_scale [1, 1]
    returns (z_location [B, Z], z_scale [B, 1])
    """
    B = x_nchw.shape[0]
    x_flat = x_nchw.reshape(B, -1)
    D_in = x_flat.shape[1]
    D_enc = params["w_enc"].shape[1]
    Z = params["w_loc"].shape[1]
    HP = max(128, ((Z + 1 + 127) // 128) * 128)   # lane-dense fused head width

    vmem_budget = _vmem_budget_bytes()
    TB, B_pad, TK, D_pad = _choose_tiles(B, D_in, tb_max, tk_max)

    # Dominant HBM byte streams (x, w_enc) in bf16; everything else f32.
    x_bf = x_flat.astype(jnp.bfloat16)
    w_enc = params["w_enc"].astype(jnp.bfloat16)
    b_enc = params["b_enc"].astype(jnp.float32).reshape(1, D_enc)

    # Fuse fc_location / fc_scale into one lane-padded [D_enc, HP] head (bf16).
    w_heads = jnp.concatenate([params["w_loc"], params["w_scale"]], axis=1)
    w_heads = jnp.pad(w_heads, ((0, 0), (0, HP - (Z + 1)))).astype(jnp.bfloat16)
    b_heads = jnp.concatenate([params["b_loc"], params["b_scale"]], axis=1)
    b_heads = jnp.pad(b_heads, ((0, 0), (0, HP - (Z + 1)))).astype(jnp.float32)

    # Padding only triggers when TK does not divide D_in (rare: _choose_tiles
    # prefers exact divisors) or B does not divide by TB.
    if B_pad != B or D_pad != D_in:
        x_bf = jnp.pad(x_bf, ((0, B_pad - B), (0, D_pad - D_in)))
    if D_pad != D_in:
        w_enc = jnp.pad(w_enc, ((0, D_pad - D_in), (0, 0)))

    # w_enc residency decision: keep the whole weight in VMEM (fetched once,
    # reused across all batch tiles) when the working set fits the budget.
    w_enc_bytes = D_pad * D_enc * 2
    small = 2 * (D_enc * HP * 2 + HP * 4 + D_enc * 4)   # heads W/b + b_enc (x2 buffers)
    resident_cost = (2 * TB * TK * 2        # x tile, double-buffered bf16
                     + 2 * w_enc_bytes      # resident w_enc (counted x2: default buffering)
                     + TB * D_enc * 4       # f32 accumulator scratch
                     + 2 * TB * HP * 4      # output block, double-buffered
                     + small)
    w_resident = resident_cost <= vmem_budget

    if w_resident:
        w_spec = pl.BlockSpec((D_pad, D_enc), lambda i, k: (0, 0))
    else:
        w_spec = pl.BlockSpec((TK, D_enc), lambda i, k: (k, 0))

    grid = (B_pad // TB, D_pad // TK)
    n_b = grid[0]

    cost = pl.CostEstimate(
        flops=2 * B_pad * D_pad * D_enc + 2 * B_pad * D_enc * HP,
        transcendentals=B_pad * (HP + 1),
        bytes_accessed=(B_pad * D_pad * 2
                        + w_enc_bytes * (1 if w_resident else n_b)
                        + B_pad * HP * 4
                        + D_enc * HP * 2),
    )

    out = pl.pallas_call(
        functools.partial(
            variational_encoder_kernel, z_dim=Z, tk=TK, w_resident=w_resident
        ),
        out_shape=jax.ShapeDtypeStruct((B_pad, HP), jnp.float32),
        grid_spec=pltpu.PrefetchScalarGridSpec(
            num_scalar_prefetch=0,
            grid=grid,
            in_specs=[
                pl.BlockSpec((TB, TK), lambda i, k: (i, k)),        # x tile (streamed)
                w_spec,                                             # w_enc (resident or streamed)
                pl.BlockSpec((1, D_enc), lambda i, k: (0, 0)),      # b_enc (resident)
                pl.BlockSpec((D_enc, HP), lambda i, k: (0, 0)),     # fused heads W (resident)
                pl.BlockSpec((1, HP), lambda i, k: (0, 0)),         # fused heads b (resident)
            ],
            out_specs=pl.BlockSpec((TB, HP), lambda i, k: (i, 0)),
            scratch_shapes=[pltpu.VMEM((TB, D_enc), jnp.float32)],
        ),
        compiler_params=pltpu.CompilerParams(
            dimension_semantics=("parallel", "arbitrary"),
            vmem_limit_bytes=int(vmem_budget),
        ),
        cost_estimate=cost,
    )(x_bf, w_enc, b_enc, w_heads, b_heads)

    z_location = out[:B, :Z]
    z_scale = out[:B, Z:Z + 1]
    return z_location, z_scale


def variational_encoder_ref(x_nchw, params):
    """Pure-JAX f32 reference (mirrors the PyTorch module)."""
    x = x_nchw.reshape(x_nchw.shape[0], -1).astype(jnp.float32)
    h = jnp.maximum(x @ params["w_enc"] + params["b_enc"], 0.0)
    loc = h @ params["w_loc"] + params["b_loc"]
    loc = loc / jnp.maximum(jnp.linalg.norm(loc, axis=1, keepdims=True), 1e-12)
    s = h @ params["w_scale"] + params["b_scale"]
    scale = jnp.where(s > 20.0, s, jnp.log1p(jnp.exp(jnp.minimum(s, 20.0)))) + 1.0
    return loc, scale


def init_params(key, d_in, encoder_out_dim, z_dim, fixed_scale=None):
    """PyTorch-Linear-like uniform fan-in init."""
    k1, k2, k3, k4, k5, k6 = jax.random.split(key, 6)

    def lin(kw, kb, fan_in, fan_out):
        bound = 1.0 / jnp.sqrt(fan_in)
        w = jax.random.uniform(kw, (fan_in, fan_out), jnp.float32, -bound, bound)
        b = jax.random.uniform(kb, (1, fan_out), jnp.float32, -bound, bound)
        return w, b

    w_enc, b_enc = lin(k1, k2, d_in, encoder_out_dim)
    w_loc, b_loc = lin(k3, k4, encoder_out_dim, z_dim)
    w_scale, b_scale = lin(k5, k6, encoder_out_dim, 1)
    if fixed_scale is not None:
        w_scale = jnp.zeros_like(w_scale)
        b_scale = jnp.full_like(b_scale, fixed_scale)
    return {
        "w_enc": w_enc, "b_enc": b_enc,
        "w_loc": w_loc, "b_loc": b_loc,
        "w_scale": w_scale, "b_scale": b_scale,
    }


if __name__ == "__main__":
    # Small shapes consistent with the module: NCHW input flattened into a
    # Linear encoder.  encoder_out_dim=32, z_dim=8.
    B, C, H, W = 2, 4, 16, 16
    D_IN = C * H * W          # 1024
    ENC_OUT = 32
    Z_DIM = 8

    key = jax.random.PRNGKey(0)
    kx, kp = jax.random.split(key)
    x = jax.random.normal(kx, (B, C, H, W), jnp.float32)
    params = init_params(kp, D_IN, ENC_OUT, Z_DIM, fixed_scale=None)

    z_location, z_scale = jax.jit(variational_encoder)(x, params)
    jax.block_until_ready((z_location, z_scale))

    # structural checks (exact regardless of bf16 input stream)
    norms = jnp.linalg.norm(z_location, axis=1)
    assert z_location.shape == (B, Z_DIM)
    assert z_scale.shape == (B, 1)
    assert bool(jnp.all(jnp.abs(norms - 1.0) < 1e-5))
    assert bool(jnp.all(z_scale > 1.0))

    # numerical check vs f32 reference (loose tolerance: x/w_enc stream in bf16)
    ref_loc, ref_scale = variational_encoder_ref(x, params)
    assert bool(jnp.max(jnp.abs(z_location - ref_loc)) < 5e-2)
    assert bool(jnp.max(jnp.abs(z_scale - ref_scale)) < 5e-2)

    print("KERNEL_OK")
</pallas_src>

<mosaic_0001>
module attributes {stable_mosaic.version = 11 : i64} {
  func.func @variational_encoder_kernel(%arg0: i32, %arg1: i32, %arg2: memref<2x1024xbf16, #tpu.memory_space<vmem>>, %arg3: memref<1024x32xbf16, #tpu.memory_space<vmem>>, %arg4: memref<1x32xf32, #tpu.memory_space<vmem>>, %arg5: memref<32x128xbf16, #tpu.memory_space<vmem>>, %arg6: memref<1x128xf32, #tpu.memory_space<vmem>>, %arg7: memref<2x128xf32, #tpu.memory_space<vmem>>, %arg8: memref<2x32xf32, #tpu.memory_space<vmem>>) attributes {dimension_semantics = [#tpu.dimension_semantics<parallel>, #tpu.dimension_semantics<arbitrary>], iteration_bounds = array<i64: 1, 1>, scalar_prefetch = 0 : i64, scratch_operands = 1 : i64, tpu.core_type = #tpu.core_type<tc>, window_params = [{transform_indices = @transform_0, window_bounds = array<i64: 2, 1024>}, {pipeline_mode = #tpu.pipeline_mode<synchronous>, transform_indices = @transform_1, window_bounds = array<i64: 1024, 32>}, {pipeline_mode = #tpu.pipeline_mode<synchronous>, transform_indices = @transform_2, window_bounds = array<i64: 1, 32>}, {pipeline_mode = #tpu.pipeline_mode<synchronous>, transform_indices = @transform_3, window_bounds = array<i64: 32, 128>}, {pipeline_mode = #tpu.pipeline_mode<synchronous>, transform_indices = @transform_4, window_bounds = array<i64: 1, 128>}, {transform_indices = @transform_5, window_bounds = array<i64: 2, 128>}]} {
    %c0_i32 = arith.constant 0 : i32
    %0 = arith.cmpi eq, %arg1, %c0_i32 : i32
    %1 = arith.extui %0 : i1 to i32
    %c0_i32_0 = arith.constant 0 : i32
    %2 = arith.cmpi ne, %1, %c0_i32_0 : i32
    scf.if %2 {
      %cst_9 = arith.constant 0.000000e+00 : f32
      %15 = vector.broadcast %cst_9 : f32 to vector<2x32xf32>
      %c0_10 = arith.constant 0 : index
      %c0_11 = arith.constant 0 : index
      %16 = vector.load %arg8[%c0_10, %c0_11] : memref<2x32xf32, #tpu.memory_space<vmem>>, vector<2x32xf32>
      tpu.vector_store %arg8[%c0_10, %c0_11], %15 {strides = array<i32>} : memref<2x32xf32, #tpu.memory_space<vmem>>, vector<2x32xf32>,
    } else {
    }
    %c1024_i32 = arith.constant 1024 : i32
    %3 = arith.muli %arg1, %c1024_i32 : i32
    %4 = tpu.assume_multiple %3, 1024 : i32
    %5 = arith.index_cast %4 : i32 to index
    %c0 = arith.constant 0 : index
    %6 = vector.load %arg3[%5, %c0] : memref<1024x32xbf16, #tpu.memory_space<vmem>>, vector<1024x32xbf16>
    %c0_1 = arith.constant 0 : index
    %c0_2 = arith.constant 0 : index
    %7 = vector.load %arg8[%c0_1, %c0_2] : memref<2x32xf32, #tpu.memory_space<vmem>>, vector<2x32xf32>
    %c0_3 = arith.constant 0 : index
    %c0_4 = arith.constant 0 : index
    %8 = vector.load %arg2[%c0_3, %c0_4] : memref<2x1024xbf16, #tpu.memory_space<vmem>>, vector<2x1024xbf16>
    %cst = arith.constant dense<0.000000e+00> : vector<2x32xf32>
    %9 = tpu.matmul %8, %6, %cst {dimension_numbers = #tpu.dot_dimension_numbers<[1], [0], [0], [1], [0, 0, 1, 1], [], []>} : vector<2x1024xbf16>, vector<1024x32xbf16>, vector<2x32xf32> -> vector<2x32xf32>
    %10 = arith.addf %7, %9 : vector<2x32xf32>
    %c0_5 = arith.constant 0 : index
    %c0_6 = arith.constant 0 : index
    %11 = vector.load %arg8[%c0_5, %c0_6] : memref<2x32xf32, #tpu.memory_space<vmem>>, vector<2x32xf32>
    tpu.vector_store %arg8[%c0_5, %c0_6], %10 {strides = array<i32>} : memref<2x32xf32, #tpu.memory_space<vmem>>, vector<2x32xf32>,
    %c0_i32_7 = arith.constant 0 : i32
    %12 = arith.cmpi eq, %arg1, %c0_i32_7 : i32
    %13 = arith.extui %12 : i1 to i32
    %c0_i32_8 = arith.constant 0 : i32
    %14 = arith.cmpi ne, %13, %c0_i32_8 : i32
    scf.if %14 {
      %c0_9 = arith.constant 0 : index
      %c0_10 = arith.constant 0 : index
      %15 = vector.load %arg8[%c0_9, %c0_10] : memref<2x32xf32, #tpu.memory_space<vmem>>, vector<2x32xf32>
      %c0_11 = arith.constant 0 : index
      %c0_12 = arith.constant 0 : index
      %16 = vector.load %arg4[%c0_11, %c0_12] : memref<1x32xf32, #tpu.memory_space<vmem>>, vector<1x32xf32>
      %17 = vector.broadcast %16 : vector<1x32xf32> to vector<2x32xf32>
      %18 = arith.addf %15, %17 : vector<2x32xf32>
      %cst_13 = arith.constant 0.000000e+00 : f32
      %19 = vector.broadcast %cst_13 : f32 to vector<2x32xf32>
      %20 = arith.maximumf %18, %19 : vector<2x32xf32>
      %21 = arith.truncf %20 : vector<2x32xf32> to vector<2x32xbf16>
      %c0_14 = arith.constant 0 : index
      %c0_15 = arith.constant 0 : index
      %22 = vector.load %arg5[%c0_14, %c0_15] : memref<32x128xbf16, #tpu.memory_space<vmem>>, vector<32x128xbf16>
      %cst_16 = arith.constant dense<0.000000e+00> : vector<2x128xf32>
      %23 = tpu.matmul %21, %22, %cst_16 {dimension_numbers = #tpu.dot_dimension_numbers<[1], [0], [0], [1], [0, 0, 1, 1], [], []>} : vector<2x32xbf16>, vector<32x128xbf16>, vector<2x128xf32> -> vector<2x128xf32>
      %c0_17 = arith.constant 0 : index
      %c0_18 = arith.constant 0 : index
      %24 = vector.load %arg6[%c0_17, %c0_18] : memref<1x128xf32, #tpu.memory_space<vmem>>, vector<1x128xf32>
      %25 = vector.broadcast %24 : vector<1x128xf32> to vector<2x128xf32>
      %26 = arith.addf %23, %25 : vector<2x128xf32>
      %27 = tpu.iota {dimensions = array<i32: 1>} : vector<2x128xi32>
      %c8_i32 = arith.constant 8 : i32
      %28 = vector.broadcast %c8_i32 : i32 to vector<2x128xi32>
      %29 = arith.cmpi slt, %27, %28 : vector<2x128xi32>
      %cst_19 = arith.constant 0.000000e+00 : f32
      %30 = vector.broadcast %cst_19 : f32 to vector<2x128xf32>
      %31 = arith.select %29, %26, %30 : vector<2x128xi1>, vector<2x128xf32>
      %32 = arith.mulf %31, %31 : vector<2x128xf32>
      %cst_20 = arith.constant dense<0.000000e+00> : vector<2xf32>
      %33 = vector.multi_reduction <add>, %32, %cst_20 [1] : vector<2x128xf32> to vector<2xf32>
      %34 = vector.shape_cast %33 : vector<2xf32> to vector<2x1xf32>
      %cst_21 = arith.constant 1.000000e-24 : f32
      %35 = vector.broadcast %cst_21 : f32 to vector<2x1xf32>
      %36 = arith.maximumf %34, %35 : vector<2x1xf32>
      %37 = math.rsqrt %36 : vector<2x1xf32>
      %cst_22 = arith.constant 2.000000e+01 : f32
      %38 = vector.broadcast %cst_22 : f32 to vector<2x128xf32>
      %39 = arith.cmpf ogt, %26, %38 : vector<2x128xf32>
      %cst_23 = arith.constant 2.000000e+01 : f32
      %40 = vector.broadcast %cst_23 : f32 to vector<2x128xf32>
      %41 = arith.minimumf %26, %40 : vector<2x128xf32>
      %42 = math.exp %41 : vector<2x128xf32>
      %43 = math.log1p %42 : vector<2x128xf32>
      %44 = arith.select %39, %26, %43 : vector<2x128xi1>, vector<2x128xf32>
      %cst_24 = arith.constant 1.000000e+00 : f32
      %45 = vector.broadcast %cst_24 : f32 to vector<2x128xf32>
      %46 = arith.addf %44, %45 : vector<2x128xf32>
      %47 = vector.broadcast %37 : vector<2x1xf32> to vector<2x128xf32>
      %48 = arith.mulf %31, %47 : vector<2x128xf32>
      %49 = arith.select %29, %48, %46 : vector<2x128xi1>, vector<2x128xf32>
      %c0_25 = arith.constant 0 : index
      %c0_26 = arith.constant 0 : index
      %50 = vector.load %arg7[%c0_25, %c0_26] : memref<2x128xf32, #tpu.memory_space<vmem>>, vector<2x128xf32>
      tpu.vector_store %arg7[%c0_25, %c0_26], %49 {strides = array<i32>} : memref<2x128xf32, #tpu.memory_space<vmem>>, vector<2x128xf32>,
    } else {
    }
    return
  }
  func.func @transform_0(%arg0: i32, %arg1: i32) -> (i32, i32) {
    %c0_i32 = arith.constant 0 : i32
    return %arg0, %arg1 : i32, i32
  }
  func.func @transform_1(%arg0: i32, %arg1: i32) -> (i32, i32) {
    %c0_i32 = arith.constant 0 : i32
    %c0_i32_0 = arith.constant 0 : i32
    %c0_i32_1 = arith.constant 0 : i32
    return %c0_i32, %c0_i32_0 : i32, i32
  }
  func.func @transform_2(%arg0: i32, %arg1: i32) -> (i32, i32) {
    %c0_i32 = arith.constant 0 : i32
    %c0_i32_0 = arith.constant 0 : i32
    %c0_i32_1 = arith.constant 0 : i32
    return %c0_i32, %c0_i32_0 : i32, i32
  }
  func.func @transform_3(%arg0: i32, %arg1: i32) -> (i32, i32) {
    %c0_i32 = arith.constant 0 : i32
    %c0_i32_0 = arith.constant 0 : i32
    %c0_i32_1 = arith.constant 0 : i32
    return %c0_i32, %c0_i32_0 : i32, i32
  }
  func.func @transform_4(%arg0: i32, %arg1: i32) -> (i32, i32) {
    %c0_i32 = arith.constant 0 : i32
    %c0_i32_0 = arith.constant 0 : i32
    %c0_i32_1 = arith.constant 0 : i32
    return %c0_i32, %c0_i32_0 : i32, i32
  }
  func.func @transform_5(%arg0: i32, %arg1: i32) -> (i32, i32) {
    %c0_i32 = arith.constant 0 : i32
    %c0_i32_0 = arith.constant 0 : i32
    return %arg0, %c0_i32 : i32, i32
  }
}

</mosaic_0001>

<llo_original>
// kernel: variational_encoder.1
$region0: #{variational_encoder.1}
  #allocation0 [shape = 'u32[]', space=smem, size = 0x4, offset = 0x4, fixed_abs, tag = 'smem constant byte address 0x4 - core index']
  #allocation1 [shape = 'u32[144,128]{1,0:T(1,128)}', space=vmem, size = 0x12000, scoped, tag = 'internal scratch']
  #allocation2 [shape = 'f32[2,32]{1,0:T(2,128)}', space=vmem, size = 0x400, scoped, tag = 'scratch operand']
  %s0 = inlined_call_operand.vmem [shape: bf16[2,1024], index: 0, kind: input, shape index: {}]
  %s1 = inlined_call_operand.vmem [shape: bf16[1024,32], index: 1, kind: input, shape index: {}]
  %s2 = inlined_call_operand.vmem [shape: f32[1,32], index: 2, kind: input, shape index: {}]
  %s3 = inlined_call_operand.vmem [shape: bf16[32,128], index: 3, kind: input, shape index: {}]
  %s4 = inlined_call_operand.vmem [shape: f32[1,128], index: 4, kind: input, shape index: {}]
  %s5 = inlined_call_operand.vmem [shape: f32[2,128], index: 5, kind: output, shape index: {}]
  %s6 = sld [smem:[#allocation0]]
  $region38: #{variational_encoder.1} parent=0
    _
  %s8 = ssub.s32 1, %s6
  %s9 = scalar_select 0, %s8, %s6
  // Predicated region
  $region2: #{variational_encoder.1} parent=0 // pred_check
    _
  $region3: #{variational_encoder.1} parent=0 // pred_check_branch
    %11 = sbr.rel (0) target = $region5
  $region4: #{variational_encoder.1} parent=0 // pred_region
    _
  $region5: #{variational_encoder.1} parent=0 // pred_fallthru
    _
  // Predicated region
  $region6: #{variational_encoder.1} parent=0 // pred_check
    _
  $region7: #{variational_encoder.1} parent=0 // pred_check_branch
    %13 = sbr.rel (0) target = $region9
  $region8: #{variational_encoder.1} parent=0 // pred_region
    _
  $region9: #{variational_encoder.1} parent=0 // pred_fallthru
    _
  // Predicated region
  $region10: #{variational_encoder.1} parent=0 // pred_check
    _
  $region11: #{variational_encoder.1} parent=0 // pred_check_branch
    %15 = sbr.rel (0) target = $region13
  $region12: #{variational_encoder.1} parent=0 // pred_region
    _
  $region13: #{variational_encoder.1} parent=0 // pred_fallthru
    _
  // Predicated region
  $region14: #{variational_encoder.1} parent=0 // pred_check
    _
  $region15: #{variational_encoder.1} parent=0 // pred_check_branch
    %17 = sbr.rel (0) target = $region17
  $region16: #{variational_encoder.1} parent=0 // pred_region
    _
  $region17: #{variational_encoder.1} parent=0 // pred_fallthru
    _
  // Predicated region
  $region18: #{variational_encoder.1} parent=0 // pred_check
    _
  $region19: #{variational_encoder.1} parent=0 // pred_check_branch
    %19 = sbr.rel (0) target = $region21
  $region20: #{variational_encoder.1} parent=0 // pred_region
    _
  $region21: #{variational_encoder.1} parent=0 // pred_fallthru
    _
  %p21 = scmp.eq.s32.totalorder 0, 0
  // Predicated region
  $region22: #{variational_encoder.1} parent=0 // pred_check
    %p22 = pneg %p21
  $region23: #{variational_encoder.1} parent=0 // pred_check_branch
    %24 = sbr.rel (%p22) target = $region25
  $region24: #{variational_encoder.1} parent=0 // pred_region
    %vm25 = vcmask 254976
    %26 = vst.msk [vmem:[#allocation2] sm:$0x3] %vm25, 0.0
  $region25: #{variational_encoder.1} parent=0 // pred_fallthru
    _
  %s27 = smul.u32 0, 1024
  %s28 = sshra.s32 %s27, 3
  %s29 = sand.u32 %s27, 7
  %s30 = smul.addr %s28, 4
  %s31 = scalar_lea.vmem %s1, %s30
  %v32 = vld [vmem:[%s31] sm:$0xf]
  %v33 = vld [vmem:[%s31 + $0x4] sm:$0xf]
  %v34 = vld [vmem:[%s31 + $0x8] sm:$0xf]
  %v35 = vld [vmem:[%s31 + $0xc] sm:$0xf]
  %v36 = vld [vmem:[%s31 + $0x10] sm:$0xf]
  %v37 = vld [vmem:[%s31 + $0x14] sm:$0xf]
  %v38 = vld [vmem:[%s31 + $0x18] sm:$0xf]
  %v39 = vld [vmem:[%s31 + $0x1c] sm:$0xf]
  %v40 = vld [vmem:[%s31 + $0x20] sm:$0xf]
  %v41 = vld [vmem:[%s31 + $0x24] sm:$0xf]
  %v42 = vld [vmem:[%s31 + $0x28] sm:$0xf]
  %v43 = vld [vmem:[%s31 + $0x2c] sm:$0xf]
  %v44 = vld [vmem:[%s31 + $0x30] sm:$0xf]
  %v45 = vld [vmem:[%s31 + $0x34] sm:$0xf]
  %v46 = vld [vmem:[%s31 + $0x38] sm:$0xf]
  %v47 = vld [vmem:[%s31 + $0x3c] sm:$0xf]
  %v48 = vld [vmem:[%s31 + $0x40] sm:$0xf]
  %v49 = vld [vmem:[%s31 + $0x44] sm:$0xf]
  %v50 = vld [vmem:[%s31 + $0x48] sm:$0xf]
  %v51 = vld [vmem:[%s31 + $0x4c] sm:$0xf]
  %v52 = vld [vmem:[%s31 + $0x50] sm:$0xf]
  %v53 = vld [vmem:[%s31 + $0x54] sm:$0xf]
  %v54 = vld [vmem:[%s31 + $0x58] sm:$0xf]
  %v55 = vld [vmem:[%s31 + $0x5c] sm:$0xf]
  %v56 = vld [vmem:[%s31 + $0x60] sm:$0xf]
  %v57 = vld [vmem:[%s31 + $0x64] sm:$0xf]
  %v58 = vld [vmem:[%s31 + $0x68] sm:$0xf]
  %v59 = vld [vmem:[%s31 + $0x6c] sm:$0xf]
  %v60 = vld [vmem:[%s31 + $0x70] sm:$0xf]
  %v61 = vld [vmem:[%s31 + $0x74] sm:$0xf]
  %v62 = vld [vmem:[%s31 + $0x78] sm:$0xf]
  %v63 = vld [vmem:[%s31 + $0x7c] sm:$0xf]
  %v64 = vld [vmem:[%s31 + $0x80] sm:$0xf]
  %v65 = vld [vmem:[%s31 + $0x84] sm:$0xf]
  %v66 = vld [vmem:[%s31 + $0x88] sm:$0xf]
  %v67 = vld [vmem:[%s31 + $0x8c] sm:$0xf]
  %v68 = vld [vmem:[%s31 + $0x90] sm:$0xf]
  %v69 = vld [vmem:[%s31 + $0x94] sm:$0xf]
  %v70 = vld [vmem:[%s31 + $0x98] sm:$0xf]
  %v71 = vld [vmem:[%s31 + $0x9c] sm:$0xf]
  %v72 = vld [vmem:[%s31 + $0xa0] sm:$0xf]
  %v73 = vld [vmem:[%s31 + $0xa4] sm:$0xf]
  %v74 = vld [vmem:[%s31 + $0xa8] sm:$0xf]
  %v75 = vld [vmem:[%s31 + $0xac] sm:$0xf]
  %v76 = vld [vmem:[%s31 + $0xb0] sm:$0xf]
  %v77 = vld [vmem:[%s31 + $0xb4] sm:$0xf]
  %v78 = vld [vmem:[%s31 + $0xb8] sm:$0xf]
  %v79 = vld [vmem:[%s31 + $0xbc] sm:$0xf]
  %v80 = vld [vmem:[%s31 + $0xc0] sm:$0xf]
  %v81 = vld [vmem:[%s31 + $0xc4] sm:$0xf]
  %v82 = vld [vmem:[%s31 + $0xc8] sm:$0xf]
  %v83 = vld [vmem:[%s31 + $0xcc] sm:$0xf]
  %v84 = vld [vmem:[%s31 + $0xd0] sm:$0xf]
  %v85 = vld [vmem:[%s31 + $0xd4] sm:$0xf]
  %v86 = vld [vmem:[%s31 + $0xd8] sm:$0xf]
  %v87 = vld [vmem:[%s31 + $0xdc] sm:$0xf]
  %v88 = vld [vmem:[%s31 + $0xe0] sm:$0xf]
  %v89 = vld [vmem:[%s31 + $0xe4] sm:$0xf]
  %v90 = vld [vmem:[%s31 + $0xe8] sm:$0xf]
  %v91 = vld [vmem:[%s31 + $0xec] sm:$0xf]
  %v92 = vld [vmem:[%s31 + $0xf0] sm:$0xf]
  %v93 = vld [vmem:[%s31 + $0xf4] sm:$0xf]
  %v94 = vld [vmem:[%s31 + $0xf8] sm:$0xf]
  %v95 = vld [vmem:[%s31 + $0xfc] sm:$0xf]
  %v96 = vld [vmem:[%s31 + $0x100] sm:$0xf]
  %v97 = vld [vmem:[%s31 + $0x104] sm:$0xf]
  %v98 = vld [vmem:[%s31 + $0x108] sm:$0xf]
  %v99 = vld [vmem:[%s31 + $0x10c] sm:$0xf]
  %v100 = vld [vmem:[%s31 + $0x110] sm:$0xf]
  %v101 = vld [vmem:[%s31 + $0x114] sm:$0xf]
  %v102 = vld [vmem:[%s31 + $0x118] sm:$0xf]
  %v103 = vld [vmem:[%s31 + $0x11c] sm:$0xf]
  %v104 = vld [vmem:[%s31 + $0x120] sm:$0xf]
  %v105 = vld [vmem:[%s31 + $0x124] sm:$0xf]
  %v106 = vld [vmem:[%s31 + $0x128] sm:$0xf]
  %v107 = vld [vmem:[%s31 + $0x12c] sm:$0xf]
  %v108 = vld [vmem:[%s31 + $0x130] sm:$0xf]
  %v109 = vld [vmem:[%s31 + $0x134] sm:$0xf]
  %v110 = vld [vmem:[%s31 + $0x138] sm:$0xf]
  %v111 = vld [vmem:[%s31 + $0x13c] sm:$0xf]
  %v112 = vld [vmem:[%s31 + $0x140] sm:$0xf]
  %v113 = vld [vmem:[%s31 + $0x144] sm:$0xf]
  %v114 = vld [vmem:[%s31 + $0x148] sm:$0xf]
  %v115 = vld [vmem:[%s31 + $0x14c] sm:$0xf]
  %v116 = vld [vmem:[%s31 + $0x150] sm:$0xf]
  %v117 = vld [vmem:[%s31 + $0x154] sm:$0xf]
  %v118 = vld [vmem:[%s31 + $0x158] sm:$0xf]
  %v119 = vld [vmem:[%s31 + $0x15c] sm:$0xf]
  %v120 = vld [vmem:[%s31 + $0x160] sm:$0xf]
  %v121 = vld [vmem:[%s31 + $0x164] sm:$0xf]
  %v122 = vld [vmem:[%s31 + $0x168] sm:$0xf]
  %v123 = vld [vmem:[%s31 + $0x16c] sm:$0xf]
  %v124 = vld [vmem:[%s31 + $0x170] sm:$0xf]
  %v125 = vld [vmem:[%s31 + $0x174] sm:$0xf]
  %v126 = vld [vmem:[%s31 + $0x178] sm:$0xf]
  %v127 = vld [vmem:[%s31 + $0x17c] sm:$0xf]
  %v128 = vld [vmem:[%s31 + $0x180] sm:$0xf]
  %v129 = vld [vmem:[%s31 + $0x184] sm:$0xf]
  %v130 = vld [vmem:[%s31 + $0x188] sm:$0xf]
  %v131 = vld [vmem:[%s31 + $0x18c] sm:$0xf]
  %v132 = vld [vmem:[%s31 + $0x190] sm:$0xf]
  %v133 = vld [vmem:[%s31 + $0x194] sm:$0xf]
  %v134 = vld [vmem:[%s31 + $0x198] sm:$0xf]
  %v135 = vld [vmem:[%s31 + $0x19c] sm:$0xf]
  %v136 = vld [vmem:[%s31 + $0x1a0] sm:$0xf]
  %v137 = vld [vmem:[%s31 + $0x1a4] sm:$0xf]
  %v138 = vld [vmem:[%s31 + $0x1a8] sm:$0xf]
  %v139 = vld [vmem:[%s31 + $0x1ac] sm:$0xf]
  %v140 = vld [vmem:[%s31 + $0x1b0] sm:$0xf]
  %v141 = vld [vmem:[%s31 + $0x1b4] sm:$0xf]
  %v142 = vld [vmem:[%s31 + $0x1b8] sm:$0xf]
  %v143 = vld [vmem:[%s31 + $0x1bc] sm:$0xf]
  %v144 = vld [vmem:[%s31 + $0x1c0] sm:$0xf]
  %v145 = vld [vmem:[%s31 + $0x1c4] sm:$0xf]
  %v146 = vld [vmem:[%s31 + $0x1c8] sm:$0xf]
  %v147 = vld [vmem:[%s31 + $0x1cc] sm:$0xf]
  %v148 = vld [vmem:[%s31 + $0x1d0] sm:$0xf]
  %v149 = vld [vmem:[%s31 + $0x1d4] sm:$0xf]
  %v150 = vld [vmem:[%s31 + $0x1d8] sm:$0xf]
  %v151 = vld [vmem:[%s31 + $0x1dc] sm:$0xf]
  %v152 = vld [vmem:[%s31 + $0x1e0] sm:$0xf]
  %v153 = vld [vmem:[%s31 + $0x1e4] sm:$0xf]
  %v154 = vld [vmem:[%s31 + $0x1e8] sm:$0xf]
  %v155 = vld [vmem:[%s31 + $0x1ec] sm:$0xf]
  %v156 = vld [vmem:[%s31 + $0x1f0] sm:$0xf]
  %v157 = vld [vmem:[%s31 + $0x1f4] sm:$0xf]
  %v158 = vld [vmem:[%s31 + $0x1f8] sm:$0xf]
  %v159 = vld [vmem:[%s31 + $0x1fc] sm:$0xf]
  %v160 = vld [vmem:[#allocation2] sm:$0x3]
  %v161 = vld [vmem:[%s0] sm:$0xff]
  %v163 = vcombine.high %v161, %v161
  %v165 = vunpack.c.l.s4 1966171168
  %v166 = vunpack.c.0.s8 %v165
  %v167 = vlaneseq
  %v168 = vshrl.u32 %v167, 7
  %v169 = vsub.s32 %v166, %v168
  %v170 = vrot.slane %v161, %v169
  %v172 = vunpack.c.l.s4 1966171168
  %v173 = vunpack.c.0.s8 %v172
  %v174 = vlaneseq
  %v175 = vshrl.u32 %v174, 7
  %v176 = vsub.s32 %v173, %v175
  %v177 = vrot.slane %v163, %v176
  %v178 = vcombine.high %v170, %v170
  %v179 = vcombine.high %v177, %v177
  %v181 = vunpack.c.l.s4 1966171168
  %v182 = vunpack.c.0.s8 %v181
  %v183 = vlaneseq
  %v184 = vshrl.u32 %v183, 7
  %v185 = vsub.s32 %v182, %v184
  %v186 = vrot.slane %v170, %v185
  %v188 = vunpack.c.l.s4 1966171168
  %v189 = vunpack.c.0.s8 %v188
  %v190 = vlaneseq
  %v191 = vshrl.u32 %v190, 7
  %v192 = vsub.s32 %v189, %v191
  %v193 = vrot.slane %v177, %v192
  %v195 = vunpack.c.l.s4 1966171168
  %v196 = vunpack.c.0.s8 %v195
  %v197 = vlaneseq
  %v198 = vshrl.u32 %v197, 7
  %v199 = vsub.s32 %v196, %v198
  %v200 = vrot.slane %v178, %v199
  %v202 = vunpack.c.l.s4 1966171168
  %v203 = vunpack.c.0.s8 %v202
  %v204 = vlaneseq
  %v205 = vshrl.u32 %v204, 7
  %v206 = vsub.s32 %v203, %v205
  %v207 = vrot.slane %v179, %v206
  %v208 = vcombine.high %v186, %v186
  %v209 = vcombine.high %v193, %v193
  %v210 = vcombine.high %v200, %v200
  %v211 = vcombine.high %v207, %v207
  %v348 = vunpack.c.l.b16 %v32
  %v349 = vunpack.c.l.b16 %v33
  %v350 = vunpack.c.l.b16 %v34
  %v351 = vunpack.c.l.b16 %v35
  %v352 = vunpack.c.l.b16 %v36
  %v353 = vunpack.c.l.b16 %v37
  %v354 = vunpack.c.l.b16 %v38
  %v355 = vunpack.c.l.b16 %v39
  %v356 = vunpack.c.l.b16 %v40
  %v357 = vunpack.c.l.b16 %v41
  %v358 = vunpack.c.l.b16 %v42
  %v359 = vunpack.c.l.b16 %v43
  %v360 = vunpack.c.l.b16 %v44
  %v361 = vunpack.c.l.b16 %v45
  %v362 = vunpack.c.l.b16 %v46
  %v363 = vunpack.c.l.b16 %v47
  %v364 = vunpack.c.l.b16 %v48
  %v365 = vunpack.c.l.b16 %v49
  %v366 = vunpack.c.l.b16 %v50
  %v367 = vunpack.c.l.b16 %v51
  %v368 = vunpack.c.l.b16 %v52
  %v369 = vunpack.c.l.b16 %v53
  %v370 = vunpack.c.l.b16 %v54
  %v371 = vunpack.c.l.b16 %v55
  %v372 = vunpack.c.l.b16 %v56
  %v373 = vunpack.c.l.b16 %v57
  %v374 = vunpack.c.l.b16 %v58
  %v375 = vunpack.c.l.b16 %v59
  %v376 = vunpack.c.l.b16 %v60
  %v377 = vunpack.c.l.b16 %v61
  %v378 = vunpack.c.l.b16 %v62
  %v379 = vunpack.c.l.b16 %v63
  %v380 = vunpack.c.l.b16 %v64
  %v381 = vunpack.c.l.b16 %v65
  %v382 = vunpack.c.l.b16 %v66
  %v383 = vunpack.c.l.b16 %v67
  %v384 = vunpack.c.l.b16 %v68
  %v385 = vunpack.c.l.b16 %v69
  %v386 = vunpack.c.l.b16 %v70
  %v387 = vunpack.c.l.b16 %v71
  %v388 = vunpack.c.l.b16 %v72
  %v389 = vunpack.c.l.b16 %v73
  %v390 = vunpack.c.l.b16 %v74
  %v391 = vunpack.c.l.b16 %v75
  %v392 = vunpack.c.l.b16 %v76
  %v393 = vunpack.c.l.b16 %v77
  %v394 = vunpack.c.l.b16 %v78
  %v395 = vunpack.c.l.b16 %v79
  %v396 = vunpack.c.l.b16 %v80
  %v397 = vunpack.c.l.b16 %v81
  %v398 = vunpack.c.l.b16 %v82
  %v399 = vunpack.c.l.b16 %v83
  %v400 = vunpack.c.l.b16 %v84
  %v401 = vunpack.c.l.b16 %v85
  %v402 = vunpack.c.l.b16 %v86
  %v403 = vunpack.c.l.b16 %v87
  %v404 = vunpack.c.l.b16 %v88
  %v405 = vunpack.c.l.b16 %v89
  %v406 = vunpack.c.l.b16 %v90
  %v407 = vunpack.c.l.b16 %v91
  %v408 = vunpack.c.l.b16 %v92
  %v409 = vunpack.c.l.b16 %v93
  %v410 = vunpack.c.l.b16 %v94
  %v411 = vunpack.c.l.b16 %v95
  %v412 = vunpack.c.l.b16 %v96
  %v413 = vunpack.c.l.b16 %v97
  %v414 = vunpack.c.l.b16 %v98
  %v415 = vunpack.c.l.b16 %v99
  %v416 = vunpack.c.l.b16 %v100
  %v417 = vunpack.c.l.b16 %v101
  %v418 = vunpack.c.l.b16 %v102
  %v419 = vunpack.c.l.b16 %v103
  %v420 = vunpack.c.l.b16 %v104
  %v421 = vunpack.c.l.b16 %v105
  %v422 = vunpack.c.l.b16 %v106
  %v423 = vunpack.c.l.b16 %v107
  %v424 = vunpack.c.l.b16 %v108
  %v425 = vunpack.c.l.b16 %v109
  %v426 = vunpack.c.l.b16 %v110
  %v427 = vunpack.c.l.b16 %v111
  %v428 = vunpack.c.l.b16 %v112
  %v429 = vunpack.c.l.b16 %v113
  %v430 = vunpack.c.l.b16 %v114
  %v431 = vunpack.c.l.b16 %v115
  %v432 = vunpack.c.l.b16 %v116
  %v433 = vunpack.c.l.b16 %v117
  %v434 = vunpack.c.l.b16 %v118
  %v435 = vunpack.c.l.b16 %v119
  %v436 = vunpack.c.l.b16 %v120
  %v437 = vunpack.c.l.b16 %v121
  %v438 = vunpack.c.l.b16 %v122
  %v439 = vunpack.c.l.b16 %v123
  %v440 = vunpack.c.l.b16 %v124
  %v441 = vunpack.c.l.b16 %v125
  %v442 = vunpack.c.l.b16 %v126
  %v443 = vunpack.c.l.b16 %v127
  %v444 = vunpack.c.l.b16 %v128
  %v445 = vunpack.c.l.b16 %v129
  %v446 = vunpack.c.l.b16 %v130
  %v447 = vunpack.c.l.b16 %v131
  %v448 = vunpack.c.l.b16 %v132
  %v449 = vunpack.c.l.b16 %v133
  %v450 = vunpack.c.l.b16 %v134
  %v451 = vunpack.c.l.b16 %v135
  %v452 = vunpack.c.l.b16 %v136
  %v453 = vunpack.c.l.b16 %v137
  %v454 = vunpack.c.l.b16 %v138
  %v455 = vunpack.c.l.b16 %v139
  %v456 = vunpack.c.l.b16 %v140
  %v457 = vunpack.c.l.b16 %v141
  %v458 = vunpack.c.l.b16 %v142
  %v459 = vunpack.c.l.b16 %v143
  %v460 = vunpack.c.l.b16 %v144
  %v461 = vunpack.c.l.b16 %v145
  %v462 = vunpack.c.l.b16 %v146
  %v463 = vunpack.c.l.b16 %v147
  %v464 = vunpack.c.l.b16 %v148
  %v465 = vunpack.c.l.b16 %v149
  %v466 = vunpack.c.l.b16 %v150
  %v467 = vunpack.c.l.b16 %v151
  %v468 = vunpack.c.l.b16 %v152
  %v469 = vunpack.c.l.b16 %v153
  %v470 = vunpack.c.l.b16 %v154
  %v471 = vunpack.c.l.b16 %v155
  %v472 = vunpack.c.l.b16 %v156
  %v473 = vunpack.c.l.b16 %v157
  %v474 = vunpack.c.l.b16 %v158
  %v475 = vunpack.c.l.b16 %v159
  %v476 = vpack.c.b16 %v349, %v348
  %v477 = vpack.c.b16 %v351, %v350
  %v478 = vpack.c.b16 %v353, %v352
  %v479 = vpack.c.b16 %v355, %v354
  %v480 = vpack.c.b16 %v357, %v356
  %v481 = vpack.c.b16 %v359, %v358
  %v482 = vpack.c.b16 %v361, %v360
  %v483 = vpack.c.b16 %v363, %v362
  %v484 = vpack.c.b16 %v365, %v364
  %v485 = vpack.c.b16 %v367, %v366
  %v486 = vpack.c.b16 %v369, %v368
  %v487 = vpack.c.b16 %v371, %v370
  %v488 = vpack.c.b16 %v373, %v372
  %v489 = vpack.c.b16 %v375, %v374
  %v490 = vpack.c.b16 %v377, %v376
  %v491 = vpack.c.b16 %v379, %v378
  %v492 = vpack.c.b16 %v381, %v380
  %v493 = vpack.c.b16 %v383, %v382
  %v494 = vpack.c.b16 %v385, %v384
  %v495 = vpack.c.b16 %v387, %v386
  %v496 = vpack.c.b16 %v389, %v388
  %v497 = vpack.c.b16 %v391, %v390
  %v498 = vpack.c.b16 %v393, %v392
  %v499 = vpack.c.b16 %v395, %v394
  %v500 = vpack.c.b16 %v397, %v396
  %v501 = vpack.c.b16 %v399, %v398
  %v502 = vpack.c.b16 %v401, %v400
  %v503 = vpack.c.b16 %v403, %v402
  %v504 = vpack.c.b16 %v405, %v404
  %v505 = vpack.c.b16 %v407, %v406
  %v506 = vpack.c.b16 %v409, %v408
  %v507 = vpack.c.b16 %v411, %v410
  %v508 = vpack.c.b16 %v413, %v412
  %v509 = vpack.c.b16 %v415, %v414
  %v510 = vpack.c.b16 %v417, %v416
  %v511 = vpack.c.b16 %v419, %v418
  %v512 = vpack.c.b16 %v421, %v420
  %v513 = vpack.c.b16 %v423, %v422
  %v514 = vpack.c.b16 %v425, %v424
  %v515 = vpack.c.b16 %v427, %v426
  %v516 = vpack.c.b16 %v429, %v428
  %v517 = vpack.c.b16 %v431, %v430
  %v518 = vpack.c.b16 %v433, %v432
  %v519 = vpack.c.b16 %v435, %v434
  %v520 = vpack.c.b16 %v437, %v436
  %v521 = vpack.c.b16 %v439, %v438
  %v522 = vpack.c.b16 %v441, %v440
  %v523 = vpack.c.b16 %v443, %v442
  %v524 = vpack.c.b16 %v445, %v444
  %v525 = vpack.c.b16 %v447, %v446
  %v526 = vpack.c.b16 %v449, %v448
  %v527 = vpack.c.b16 %v451, %v450
  %v528 = vpack.c.b16 %v453, %v452
  %v529 = vpack.c.b16 %v455, %v454
  %v530 = vpack.c.b16 %v457, %v456
  %v531 = vpack.c.b16 %v459, %v458
  %v532 = vpack.c.b16 %v461, %v460
  %v533 = vpack.c.b16 %v463, %v462
  %v534 = vpack.c.b16 %v465, %v464
  %v535 = vpack.c.b16 %v467, %v466
  %v536 = vpack.c.b16 %v469, %v468
  %v537 = vpack.c.b16 %v471, %v470
  %v538 = vpack.c.b16 %v473, %v472
  %v539 = vpack.c.b16 %v475, %v474
  %604 = vmatprep.subr.bf16.mxu0 0
  %605 = vmatpush1.bf16.msra.mxu0 %v483
  %606 = vmatprep.subr.bf16.mxu0 0
  %607 = vmatpush1.bf16.msra.mxu0 %v482
  %608 = vmatprep.subr.bf16.mxu0 0
  %609 = vmatpush1.bf16.msra.mxu0 %v481
  %610 = vmatprep.subr.bf16.mxu0 0
  %611 = vmatpush1.bf16.msra.mxu0 %v480
  %612 = vmatprep.subr.bf16.mxu0 0
  %613 = vmatpush1.bf16.msra.mxu0 %v479
  %614 = vmatprep.subr.bf16.mxu0 0
  %615 = vmatpush1.bf16.msra.mxu0 %v478
  %616 = vmatprep.subr.bf16.mxu0 0
  %617 = vmatpush1.bf16.msra.mxu0 %v477
  %618 = vmatprep.subr.bf16.mxu0 0
  %619 = vmatpush1.bf16.msra.mxu0 %v476
  %620 = vmatprep.subr.bf16.mxu0 0
  %621 = vmatpush2.bf16.msra.mxu0 %v491
  %622 = vmatprep.subr.bf16.mxu0 0
  %623 = vmatpush2.bf16.msra.mxu0 %v490
  %624 = vmatprep.subr.bf16.mxu0 0
  %625 = vmatpush2.bf16.msra.mxu0 %v489
  %626 = vmatprep.subr.bf16.mxu0 0
  %627 = vmatpush2.bf16.msra.mxu0 %v488
  %628 = vmatprep.subr.bf16.mxu0 0
  %629 = vmatpush2.bf16.msra.mxu0 %v487
  %630 = vmatprep.subr.bf16.mxu0 0
  %631 = vmatpush2.bf16.msra.mxu0 %v486
  %632 = vmatprep.subr.bf16.mxu0 0
  %633 = vmatpush2.bf16.msra.mxu0 %v485
  %634 = vmatprep.subr.bf16.mxu0 0
  %635 = vmatpush2.bf16.msra.mxu0 %v484
  %636 = vmatprep.mubr.bf16.mxu0 %v200
  %637 = vmatmul.mubr.bf16.gmra.mxu0 %v186
  %v638 = vpop.f32.mrf.mxu0
  %v639 = vadd.f32 0.0, %v638
  %v640 = vpop.f32.mrf.mxu0
  %v641 = vpop.f32.mrf.mxu0
  %v642 = vpop.f32.mrf.mxu0
  %643 = vdwg.mxu0
  %644 = vmatprep.subr.bf16.mxu0 0
  %645 = vmatpush1.bf16.msra.mxu0 %v499
  %646 = vmatprep.subr.bf16.mxu0 0
  %647 = vmatpush1.bf16.msra.mxu0 %v498
  %648 = vmatprep.subr.bf16.mxu0 0
  %649 = vmatpush1.bf16.msra.mxu0 %v497
  %650 = vmatprep.subr.bf16.mxu0 0
  %651 = vmatpush1.bf16.msra.mxu0 %v496
  %652 = vmatprep.subr.bf16.mxu0 0
  %653 = vmatpush1.bf16.msra.mxu0 %v495
  %654 = vmatprep.subr.bf16.mxu0 0
  %655 = vmatpush1.bf16.msra.mxu0 %v494
  %656 = vmatprep.subr.bf16.mxu0 0
  %657 = vmatpush1.bf16.msra.mxu0 %v493
  %658 = vmatprep.subr.bf16.mxu0 0
  %659 = vmatpush1.bf16.msra.mxu0 %v492
  %660 = vmatprep.subr.bf16.mxu0 0
  %661 = vmatpush2.bf16.msra.mxu0 %v507
  %662 = vmatprep.subr.bf16.mxu0 0
  %663 = vmatpush2.bf16.msra.mxu0 %v506
  %664 = vmatprep.subr.bf16.mxu0 0
  %665 = vmatpush2.bf16.msra.mxu0 %v505
  %666 = vmatprep.subr.bf16.mxu0 0
  %667 = vmatpush2.bf16.msra.mxu0 %v504
  %668 = vmatprep.subr.bf16.mxu0 0
  %669 = vmatpush2.bf16.msra.mxu0 %v503
  %670 = vmatprep.subr.bf16.mxu0 0
  %671 = vmatpush2.bf16.msra.mxu0 %v502
  %672 = vmatprep.subr.bf16.mxu0 0
  %673 = vmatpush2.bf16.msra.mxu0 %v501
  %674 = vmatprep.subr.bf16.mxu0 0
  %675 = vmatpush2.bf16.msra.mxu0 %v500
  %676 = vmatprep.mubr.bf16.mxu0 %v210
  %677 = vmatmul.mubr.bf16.gmra.mxu0 %v208
  %v678 = vpop.f32.mrf.mxu0
  %v679 = vadd.f32 %v639, %v678
  %v680 = vpop.f32.mrf.mxu0
  %v681 = vpop.f32.mrf.mxu0
  %v682 = vpop.f32.mrf.mxu0
  %683 = vdwg.mxu0
  %684 = vmatprep.subr.bf16.mxu0 0
  %685 = vmatpush1.bf16.msra.mxu0 %v515
  %686 = vmatprep.subr.bf16.mxu0 0
  %687 = vmatpush1.bf16.msra.mxu0 %v514
  %688 = vmatprep.subr.bf16.mxu0 0
  %689 = vmatpush1.bf16.msra.mxu0 %v513
  %690 = vmatprep.subr.bf16.mxu0 0
  %691 = vmatpush1.bf16.msra.mxu0 %v512
  %692 = vmatprep.subr.bf16.mxu0 0
  %693 = vmatpush1.bf16.msra.mxu0 %v511
  %694 = vmatprep.subr.bf16.mxu0 0
  %695 = vmatpush1.bf16.msra.mxu0 %v510
  %696 = vmatprep.subr.bf16.mxu0 0
  %697 = vmatpush1.bf16.msra.mxu0 %v509
  %698 = vmatprep.subr.bf16.mxu0 0
  %699 = vmatpush1.bf16.msra.mxu0 %v508
  %700 = vmatprep.subr.bf16.mxu0 0
  %701 = vmatpush2.bf16.msra.mxu0 %v523
  %702 = vmatprep.subr.bf16.mxu0 0
  %703 = vmatpush2.bf16.msra.mxu0 %v522
  %704 = vmatprep.subr.bf16.mxu0 0
  %705 = vmatpush2.bf16.msra.mxu0 %v521
  %706 = vmatprep.subr.bf16.mxu0 0
  %707 = vmatpush2.bf16.msra.mxu0 %v520
  %708 = vmatprep.subr.bf16.mxu0 0
  %709 = vmatpush2.bf16.msra.mxu0 %v519
  %710 = vmatprep.subr.bf16.mxu0 0
  %711 = vmatpush2.bf16.msra.mxu0 %v518
  %712 = vmatprep.subr.bf16.mxu0 0
  %713 = vmatpush2.bf16.msra.mxu0 %v517
  %714 = vmatprep.subr.bf16.mxu0 0
  %715 = vmatpush2.bf16.msra.mxu0 %v516
  %716 = vmatprep.mubr.bf16.mxu0 %v207
  %717 = vmatmul.mubr.bf16.gmra.mxu0 %v193
  %v718 = vpop.f32.mrf.mxu0
  %v719 = vadd.f32 %v679, %v718
  %v720 = vpop.f32.mrf.mxu0
  %v721 = vpop.f32.mrf.mxu0
  %v722 = vpop.f32.mrf.mxu0
  %723 = vdwg.mxu0
  %724 = vmatprep.subr.bf16.mxu0 0
  %725 = vmatpush1.bf16.msra.mxu0 %v531
  %726 = vmatprep.subr.bf16.mxu0 0
  %727 = vmatpush1.bf16.msra.mxu0 %v530
  %728 = vmatprep.subr.bf16.mxu0 0
  %729 = vmatpush1.bf16.msra.mxu0 %v529
  %730 = vmatprep.subr.bf16.mxu0 0
  %731 = vmatpush1.bf16.msra.mxu0 %v528
  %732 = vmatprep.subr.bf16.mxu0 0
  %733 = vmatpush1.bf16.msra.mxu0 %v527
  %734 = vmatprep.subr.bf16.mxu0 0
  %735 = vmatpush1.bf16.msra.mxu0 %v526
  %736 = vmatprep.subr.bf16.mxu0 0
  %737 = vmatpush1.bf16.msra.mxu0 %v525
  %738 = vmatprep.subr.bf16.mxu0 0
  %739 = vmatpush1.bf16.msra.mxu0 %v524
  %740 = vmatprep.subr.bf16.mxu0 0
  %741 = vmatpush2.bf16.msra.mxu0 %v539
  %742 = vmatprep.subr.bf16.mxu0 0
  %743 = vmatpush2.bf16.msra.mxu0 %v538
  %744 = vmatprep.subr.bf16.mxu0 0
  %745 = vmatpush2.bf16.msra.mxu0 %v537
  %746 = vmatprep.subr.bf16.mxu0 0
  %747 = vmatpush2.bf16.msra.mxu0 %v536
  %748 = vmatprep.subr.bf16.mxu0 0
  %749 = vmatpush2.bf16.msra.mxu0 %v535
  %750 = vmatprep.subr.bf16.mxu0 0
  %751 = vmatpush2.bf16.msra.mxu0 %v534
  %752 = vmatprep.subr.bf16.mxu0 0
  %753 = vmatpush2.bf16.msra.mxu0 %v533
  %754 = vmatprep.subr.bf16.mxu0 0
  %755 = vmatpush2.bf16.msra.mxu0 %v532
  %756 = vmatprep.mubr.bf16.mxu0 %v211
  %757 = vmatmul.mubr.bf16.gmra.mxu0 %v209
  %v758 = vpop.f32.mrf.mxu0
  %v759 = vadd.f32 %v719, %v758
  %v760 = vpop.f32.mrf.mxu0
  %v761 = vpop.f32.mrf.mxu0
  %v762 = vpop.f32.mrf.mxu0
  %763 = vdwg.mxu0
  %v764 = vadd.f32 %v160, %v759
  %vm765 = vcmask 254976
  %766 = vst.msk [vmem:[#allocation2] sm:$0x3] %vm765, %v764
  // Predicated region
  $region26: #{variational_encoder.1} parent=0 // pred_check
    %p767 = pneg %p21
  $region27: #{variational_encoder.1} parent=0 // pred_check_branch
    %769 = sbr.rel (%p767) target = $region29
  $region28: #{variational_encoder.1} parent=0 // pred_region
    %v770 = vld [vmem:[#allocation2] sm:$0x3]
    %v771 = vld [vmem:[%s2] sm:$0x1]
    %v773 = vlaneseq
    %v774 = vshrl.u32 %v773, 7
    %v775 = vsub.s32 0, %v774
    %v776 = vrot.slane %v771, %v775
    %v778 = vadd.f32 %v770, %v776
    %v779 = vmax.f32 %v778, 0.0
    %v780 = vpack.c.bf16 %v779, %v779
    %v781 = vld [vmem:[%s3] sm:$0xf]
    %v782 = vld [vmem:[%s3 + $0x4] sm:$0xf]
    %v783 = vld [vmem:[%s3 + $0x8] sm:$0xf]
    %v784 = vld [vmem:[%s3 + $0xc] sm:$0xf]
    %v785 = vld [vmem:[%s4] sm:$0x1]
    %v787 = vlaneseq
    %v788 = vshrl.u32 %v787, 7
    %v789 = vsub.s32 0, %v788
    %v790 = vrot.slane %v785, %v789
    %v796 = vunpack.c.l.b16 %v781
    %v797 = vunpack.c.l.b16 %v782
    %v798 = vunpack.c.l.b16 %v783
    %v799 = vunpack.c.l.b16 %v784
    %v800 = vpack.c.b16 %v797, %v796
    %v801 = vpack.c.b16 %v799, %v798
    %vm804 = vcmask 261120
    %v806 = vsel %vm804, %v780, 0
    %808 = vmatprep.subr.bf16.mxu0 0
    %809 = vmatpush1.bf16.msra.mxu0 0
    %810 = vmatprep.subr.bf16.mxu0 0
    %811 = vmatpush1.bf16.msra.mxu0 0
    %812 = vmatprep.subr.bf16.mxu0 0
    %813 = vmatpush1.bf16.msra.mxu0 0
    %814 = vmatprep.subr.bf16.mxu0 0
    %815 = vmatpush1.bf16.msra.mxu0 0
    %816 = vmatprep.subr.bf16.mxu0 0
    %817 = vmatpush1.bf16.msra.mxu0 0
    %818 = vmatprep.subr.bf16.mxu0 0
    %819 = vmatpush1.bf16.msra.mxu0 0
    %820 = vmatprep.subr.bf16.mxu0 0
    %821 = vmatpush1.bf16.msra.mxu0 %v801
    %822 = vmatprep.subr.bf16.mxu0 0
    %823 = vmatpush1.bf16.msra.mxu0 %v800
    %824 = vmatprep.subr.bf16.mxu0 0
    %825 = vmatpush2.bf16.msra.mxu0 0
    %826 = vmatprep.subr.bf16.mxu0 0
    %827 = vmatpush2.bf16.msra.mxu0 0
    %828 = vmatprep.subr.bf16.mxu0 0
    %829 = vmatpush2.bf16.msra.mxu0 0
    %830 = vmatprep.subr.bf16.mxu0 0
    %831 = vmatpush2.bf16.msra.mxu0 0
    %832 = vmatprep.subr.bf16.mxu0 0
    %833 = vmatpush2.bf16.msra.mxu0 0
    %834 = vmatprep.subr.bf16.mxu0 0
    %835 = vmatpush2.bf16.msra.mxu0 0
    %836 = vmatprep.subr.bf16.mxu0 0
    %837 = vmatpush2.bf16.msra.mxu0 0
    %838 = vmatprep.subr.bf16.mxu0 0
    %839 = vmatpush2.bf16.msra.mxu0 0
    %840 = vmatprep.mubr.bf16.mxu0 0
    %841 = vmatmul.mubr.bf16.gmra.mxu0 %v806
    %v842 = vpop.f32.mrf.mxu0
    %v843 = vadd.f32 %v790, %v842
    %v844 = vpop.f32.mrf.mxu0
    %v845 = vpop.f32.mrf.mxu0
    %v846 = vpop.f32.mrf.mxu0
    %847 = vdwg.mxu0
    %v848 = vlaneseq
    %v849 = vand.u32 %v848, 127
    %vm850 = vcmp.lt.s32.totalorder %v849, 8
    %v851 = vsel %vm850, %v843, 0.0
    %v852 = vmul.f32 %v851, %v851
    %vm853 = vcmask 1041408
    %v854 = vsel %vm853, %v852, 0.0
    %855 = vadd.xlane.f32.xlu0 %v854
    %v856 = vpop.xlane.xlu0 %855
    %v857 = vmax.f32 %v856, 1e-24
    %v858 = vrsqrt.pop %v857
    %vm859 = vcmp.gt.f32.partialorder %v843, 20.0
    %v860 = vmin.f32 %v843, 20.0
    %v861 = vmul.f32 %v860, 1.442695
    %v862 = vpow.pop %v861
    %v863 = vadd.f32 %v862, 1.0
    %v864 = vlog2.pop %v863
    %v865 = vmul.f32 %v864, 0.6931472
    %v866 = vmul.f32 -0.5, %v862
    %v867 = vadd.f32 %v866, 1.0
    %v868 = vmul.f32 %v867, %v862
    %v869 = vand.u32 2147483647, %v862
    %vm870 = vcmp.lt.f32.partialorder %v869, 0.0004427343
    %v871 = vsel %vm870, %v868, %v865
    %v872 = vsel %vm859, %v843, %v871
    %v873 = vadd.f32 %v872, 1.0
    %v874 = vmul.f32 %v851, %v858
    %v875 = vsel %vm850, %v874, %v873
    %876 = vst [vmem:[%s5] sm:$0x3] %v875
  $region29: #{variational_encoder.1} parent=0 // pred_fallthru
    _
  // Predicated region
  $region30: #{variational_encoder.1} parent=0 // pred_check
    _
  $region31: #{variational_encoder.1} parent=0 // pred_check_branch
    %878 = sbr.rel (0) target = $region33
  $region32: #{variational_encoder.1} parent=0 // pred_region
    _
  $region33: #{variational_encoder.1} parent=0 // pred_fallthru
    _
  // Predicated region
  $region34: #{variational_encoder.1} parent=0 // pred_check
    _
  $region35: #{variational_encoder.1} parent=0 // pred_check_branch
    %880 = sbr.rel (0) target = $region37
  $region36: #{variational_encoder.1} parent=0 // pred_region
    _
  $region37: #{variational_encoder.1} parent=0 // pred_fallthru
    _

</llo_original>
